<compile_context>
chip_gen: v5e
topology: v5e:2x2
jax: 0.10.0
libtpu: 0.0.40
codegen_flags: <defaults>
</compile_context>

<pallas_src>
import functools

import jax
import jax.numpy as jnp
from jax.experimental import pallas as pl
from jax.experimental.pallas import tpu as pltpu


# ----------------------------------------------------------------------------
# Fused kernel: x holds ALL rows (B*N c_v rows, then B v_c rows, then padding)
#   logits = Linear(GELU(Linear(LN(x))))            [M_pad, C]
#   y[b]   = logits_cv[b] + logits_vc[b]            [N, C] (broadcast over N)
#   out    = softmax(y, axis=-1)                    [B, N, C]
# ----------------------------------------------------------------------------
def cls_head_kernel(x_ref, g_ref, beta_ref, w1_ref, b1_ref, w2_ref, b2_ref,
                    o_ref, *, B, N, C):
    BN = B * N
    x = x_ref[...].astype(jnp.float32)           # [M_pad, D] bf16 -> f32
    gamma = g_ref[...]                           # [1, D]
    beta = beta_ref[...]                         # [1, D]

    # LayerNorm (eps matches nn.LayerNorm default 1e-5), one-pass statistics:
    # sum(x) and sum(x*x) are independent reductions.
    mu = jnp.mean(x, axis=-1, keepdims=True)
    ex2 = jnp.mean(x * x, axis=-1, keepdims=True)
    var = ex2 - mu * mu
    xn = (x - mu) * jax.lax.rsqrt(var + 1e-5) * gamma + beta

    # Linear -> GELU -> Linear. bf16 operands, f32 accumulation. Both branches
    # share the same LHS, so each matmul is a single MXU push sequence.
    h = jnp.dot(xn.astype(jnp.bfloat16), w1_ref[...],
                preferred_element_type=jnp.float32) + b1_ref[...]
    # TODO(synk): PyTorch nn.GELU() default is exact erf; tanh approximation
    # used since erf lowering is not guaranteed in Mosaic.
    h = 0.5 * h * (1.0 + jnp.tanh(0.7978845608028654
                                  * (h + 0.044715 * h * h * h)))
    logits = jnp.dot(h.astype(jnp.bfloat16), w2_ref[...],
                     preferred_element_type=jnp.float32) + b2_ref[...]

    # Split branches: rows [0, B*N) are c_v, rows [B*N, B*N+B) are v_c.
    la = logits[:BN].reshape(B, N, C)            # [B, N, C]
    lb = logits[BN:BN + B].reshape(B, 1, C)      # [B, 1, C]
    y = la + lb                                  # PyTorch c_v + v_c broadcast

    # Softmax with EXACT normalization (rows must sum to 1).
    m = jnp.max(y, axis=-1, keepdims=True)
    p = jnp.exp(y - m)
    o_ref[...] = p / jnp.sum(p, axis=-1, keepdims=True)


# ----------------------------------------------------------------------------
# Wrapper
# ----------------------------------------------------------------------------
def classification_head(c_v, v_c, params):
    """c_v: [B, N, S, D], v_c: [B, S, D] -> softmax probabilities [B, N, C]."""
    B, N, _, D = c_v.shape
    H = params["w1"].shape[1]
    C = params["w2"].shape[1]

    # S=0 slices + branch merge (thin JAX glue): stack all rows of BOTH
    # branches into one lane-dense [M, D] LHS for a single fused kernel call.
    cv = c_v[:, :, 0, :].reshape(B * N, D)       # [B*N, D]
    vc = v_c[:, 0, :]                            # [B, D]
    x = jnp.concatenate([cv, vc], axis=0)        # [B*N + B, D]
    pad = (-x.shape[0]) % 8                      # sublane-align the LHS rows
    if pad:
        x = jnp.concatenate([x, jnp.zeros((pad, D), x.dtype)], axis=0)
    x = x.astype(jnp.bfloat16)                   # halve activation HBM read

    w1 = params["w1"].astype(jnp.bfloat16)       # [D, H]
    w2 = params["w2"].astype(jnp.bfloat16)       # [H, C]
    gamma = params["gamma"].reshape(1, D).astype(jnp.float32)
    beta = params["beta"].reshape(1, D).astype(jnp.float32)
    b1 = params["b1"].reshape(1, H).astype(jnp.float32)
    b2 = params["b2"].reshape(1, C).astype(jnp.float32)

    kernel = functools.partial(cls_head_kernel, B=B, N=N, C=C)

    # Single grid step: everything (bf16 activations + weights) is resident in
    # VMEM, so there is no per-step pipeline overhead at these sizes.
    return pl.pallas_call(
        kernel,
        out_shape=jax.ShapeDtypeStruct((B, N, C), jnp.float32),
        in_specs=[pl.BlockSpec(memory_space=pltpu.MemorySpace.VMEM)
                  for _ in range(7)],
        out_specs=pl.BlockSpec(memory_space=pltpu.MemorySpace.VMEM),
    )(x, gamma, beta, w1, b1, w2, b2)


# ----------------------------------------------------------------------------
# Pure-JAX reference (f32 everywhere) for a sanity check
# ----------------------------------------------------------------------------
def classification_head_ref(c_v, v_c, params):
    def mlp(t):
        mu = jnp.mean(t, axis=-1, keepdims=True)
        var = jnp.mean((t - mu) ** 2, axis=-1, keepdims=True)
        tn = (t - mu) * jax.lax.rsqrt(var + 1e-5) * params["gamma"] + params["beta"]
        h = tn @ params["w1"] + params["b1"]
        h = 0.5 * h * (1.0 + jnp.tanh(0.7978845608028654
                                      * (h + 0.044715 * h * h * h)))
        return h @ params["w2"] + params["b2"]

    a = mlp(c_v[:, :, 0, :])                     # [B, N, C]
    b = mlp(v_c[:, 0, :])                        # [B, C]
    return jax.nn.softmax(a + b[:, None, :], axis=-1)


# ----------------------------------------------------------------------------
if __name__ == "__main__":
    # Small demo shapes; feature dims chosen lane-dense (multiples of 128).
    B, N, S = 2, 8, 4
    embed_dim, hidden_dim, num_classes = 128, 256, 128

    key = jax.random.PRNGKey(0)
    k_cv, k_vc, k_w1, k_b1, k_w2, k_b2 = jax.random.split(key, 6)

    c_v = jax.random.normal(k_cv, (B, N, S, embed_dim), jnp.float32)
    v_c = jax.random.normal(k_vc, (B, S, embed_dim), jnp.float32)

    params = dict(
        gamma=jnp.ones((embed_dim,), jnp.float32),
        beta=jnp.zeros((embed_dim,), jnp.float32),
        w1=0.02 * jax.random.normal(k_w1, (embed_dim, hidden_dim), jnp.float32),
        b1=0.02 * jax.random.normal(k_b1, (hidden_dim,), jnp.float32),
        w2=0.02 * jax.random.normal(k_w2, (hidden_dim, num_classes), jnp.float32),
        b2=0.02 * jax.random.normal(k_b2, (num_classes,), jnp.float32),
    )

    out = classification_head(c_v, v_c, params)
    out = jax.block_until_ready(out)
    assert out.shape == (B, N, num_classes)

    # Sanity check vs. f32 reference (bf16 inputs/matmuls => loose tolerance).
    ref = jax.block_until_ready(classification_head_ref(c_v, v_c, params))
    assert jnp.allclose(out, ref, atol=2e-2), float(jnp.max(jnp.abs(out - ref)))
    # Exact softmax normalization: rows sum to 1 within f32 rounding.
    assert jnp.allclose(jnp.sum(out, axis=-1), 1.0, atol=1e-3)

    print("KERNEL_OK")
</pallas_src>

<mosaic_0001>
module attributes {stable_mosaic.version = 11 : i64} {
  func.func @cls_head_kernel(%arg0: memref<24x128xbf16, #tpu.memory_space<vmem>>, %arg1: memref<1x128xf32, #tpu.memory_space<vmem>>, %arg2: memref<1x128xf32, #tpu.memory_space<vmem>>, %arg3: memref<128x256xbf16, #tpu.memory_space<vmem>>, %arg4: memref<1x256xf32, #tpu.memory_space<vmem>>, %arg5: memref<256x128xbf16, #tpu.memory_space<vmem>>, %arg6: memref<1x128xf32, #tpu.memory_space<vmem>>, %arg7: memref<2x8x128xf32, #tpu.memory_space<vmem>>) attributes {dimension_semantics = [], scalar_prefetch = 0 : i64, scratch_operands = 0 : i64, tpu.core_type = #tpu.core_type<tc>} {
    %c0 = arith.constant 0 : index
    %c0_0 = arith.constant 0 : index
    %0 = vector.load %arg0[%c0, %c0_0] : memref<24x128xbf16, #tpu.memory_space<vmem>>, vector<24x128xbf16>
    %1 = arith.extf %0 : vector<24x128xbf16> to vector<24x128xf32>
    %c0_1 = arith.constant 0 : index
    %c0_2 = arith.constant 0 : index
    %2 = vector.load %arg1[%c0_1, %c0_2] : memref<1x128xf32, #tpu.memory_space<vmem>>, vector<1x128xf32>
    %c0_3 = arith.constant 0 : index
    %c0_4 = arith.constant 0 : index
    %3 = vector.load %arg2[%c0_3, %c0_4] : memref<1x128xf32, #tpu.memory_space<vmem>>, vector<1x128xf32>
    %cst = arith.constant dense<0.000000e+00> : vector<24xf32>
    %4 = vector.multi_reduction <add>, %1, %cst [1] : vector<24x128xf32> to vector<24xf32>
    %5 = vector.shape_cast %4 : vector<24xf32> to vector<24x1xf32>
    %cst_5 = arith.constant 1.280000e+02 : f32
    %6 = vector.broadcast %cst_5 : f32 to vector<24x1xf32>
    %7 = arith.divf %5, %6 : vector<24x1xf32>
    %8 = arith.mulf %1, %1 : vector<24x128xf32>
    %cst_6 = arith.constant dense<0.000000e+00> : vector<24xf32>
    %9 = vector.multi_reduction <add>, %8, %cst_6 [1] : vector<24x128xf32> to vector<24xf32>
    %10 = vector.shape_cast %9 : vector<24xf32> to vector<24x1xf32>
    %cst_7 = arith.constant 1.280000e+02 : f32
    %11 = vector.broadcast %cst_7 : f32 to vector<24x1xf32>
    %12 = arith.divf %10, %11 : vector<24x1xf32>
    %13 = arith.mulf %7, %7 : vector<24x1xf32>
    %14 = arith.subf %12, %13 : vector<24x1xf32>
    %15 = vector.broadcast %7 : vector<24x1xf32> to vector<24x128xf32>
    %16 = arith.subf %1, %15 : vector<24x128xf32>
    %cst_8 = arith.constant 9.99999974E-6 : f32
    %17 = vector.broadcast %cst_8 : f32 to vector<24x1xf32>
    %18 = arith.addf %14, %17 : vector<24x1xf32>
    %19 = math.rsqrt %18 : vector<24x1xf32>
    %20 = vector.broadcast %19 : vector<24x1xf32> to vector<24x128xf32>
    %21 = arith.mulf %16, %20 : vector<24x128xf32>
    %22 = vector.broadcast %2 : vector<1x128xf32> to vector<24x128xf32>
    %23 = arith.mulf %21, %22 : vector<24x128xf32>
    %24 = vector.broadcast %3 : vector<1x128xf32> to vector<24x128xf32>
    %25 = arith.addf %23, %24 : vector<24x128xf32>
    %26 = arith.truncf %25 : vector<24x128xf32> to vector<24x128xbf16>
    %c0_9 = arith.constant 0 : index
    %c0_10 = arith.constant 0 : index
    %27 = vector.load %arg3[%c0_9, %c0_10] : memref<128x256xbf16, #tpu.memory_space<vmem>>, vector<128x256xbf16>
    %cst_11 = arith.constant dense<0.000000e+00> : vector<24x256xf32>
    %28 = tpu.matmul %26, %27, %cst_11 {dimension_numbers = #tpu.dot_dimension_numbers<[1], [0], [0], [1], [0, 0, 1, 1], [], []>} : vector<24x128xbf16>, vector<128x256xbf16>, vector<24x256xf32> -> vector<24x256xf32>
    %c0_12 = arith.constant 0 : index
    %c0_13 = arith.constant 0 : index
    %29 = vector.load %arg4[%c0_12, %c0_13] : memref<1x256xf32, #tpu.memory_space<vmem>>, vector<1x256xf32>
    %30 = vector.broadcast %29 : vector<1x256xf32> to vector<24x256xf32>
    %31 = arith.addf %28, %30 : vector<24x256xf32>
    %cst_14 = arith.constant 5.000000e-01 : f32
    %32 = vector.broadcast %cst_14 : f32 to vector<24x256xf32>
    %33 = arith.mulf %32, %31 : vector<24x256xf32>
    %cst_15 = arith.constant 4.471500e-02 : f32
    %34 = vector.broadcast %cst_15 : f32 to vector<24x256xf32>
    %35 = arith.mulf %34, %31 : vector<24x256xf32>
    %36 = arith.mulf %35, %31 : vector<24x256xf32>
    %37 = arith.mulf %36, %31 : vector<24x256xf32>
    %38 = arith.addf %31, %37 : vector<24x256xf32>
    %cst_16 = arith.constant 0.797884583 : f32
    %39 = vector.broadcast %cst_16 : f32 to vector<24x256xf32>
    %40 = arith.mulf %39, %38 : vector<24x256xf32>
    %41 = math.tanh %40 : vector<24x256xf32>
    %cst_17 = arith.constant 1.000000e+00 : f32
    %42 = vector.broadcast %cst_17 : f32 to vector<24x256xf32>
    %43 = arith.addf %42, %41 : vector<24x256xf32>
    %44 = arith.mulf %33, %43 : vector<24x256xf32>
    %45 = arith.truncf %44 : vector<24x256xf32> to vector<24x256xbf16>
    %c0_18 = arith.constant 0 : index
    %c0_19 = arith.constant 0 : index
    %46 = vector.load %arg5[%c0_18, %c0_19] : memref<256x128xbf16, #tpu.memory_space<vmem>>, vector<256x128xbf16>
    %cst_20 = arith.constant dense<0.000000e+00> : vector<24x128xf32>
    %47 = tpu.matmul %45, %46, %cst_20 {dimension_numbers = #tpu.dot_dimension_numbers<[1], [0], [0], [1], [0, 0, 1, 1], [], []>} : vector<24x256xbf16>, vector<256x128xbf16>, vector<24x128xf32> -> vector<24x128xf32>
    %c0_21 = arith.constant 0 : index
    %c0_22 = arith.constant 0 : index
    %48 = vector.load %arg6[%c0_21, %c0_22] : memref<1x128xf32, #tpu.memory_space<vmem>>, vector<1x128xf32>
    %49 = vector.broadcast %48 : vector<1x128xf32> to vector<24x128xf32>
    %50 = arith.addf %47, %49 : vector<24x128xf32>
    %51 = vector.extract_strided_slice %50 {offsets = [0, 0], sizes = [16, 128], strides = [1, 1]} : vector<24x128xf32> to vector<16x128xf32>
    %52 = vector.shape_cast %51 : vector<16x128xf32> to vector<2x8x128xf32>
    %53 = vector.extract_strided_slice %50 {offsets = [16, 0], sizes = [2, 128], strides = [1, 1]} : vector<24x128xf32> to vector<2x128xf32>
    %54 = vector.shape_cast %53 : vector<2x128xf32> to vector<2x1x128xf32>
    %55 = vector.broadcast %54 : vector<2x1x128xf32> to vector<2x8x128xf32>
    %56 = arith.addf %52, %55 : vector<2x8x128xf32>
    %cst_23 = arith.constant dense<0xFF800000> : vector<2x8xf32>
    %57 = vector.multi_reduction <maximumf>, %56, %cst_23 [2] : vector<2x8x128xf32> to vector<2x8xf32>
    %58 = vector.shape_cast %57 : vector<2x8xf32> to vector<2x8x1xf32>
    %59 = vector.broadcast %58 : vector<2x8x1xf32> to vector<2x8x128xf32>
    %60 = arith.subf %56, %59 : vector<2x8x128xf32>
    %61 = math.exp %60 : vector<2x8x128xf32>
    %cst_24 = arith.constant dense<0.000000e+00> : vector<2x8xf32>
    %62 = vector.multi_reduction <add>, %61, %cst_24 [2] : vector<2x8x128xf32> to vector<2x8xf32>
    %63 = vector.shape_cast %62 : vector<2x8xf32> to vector<2x8x1xf32>
    %64 = vector.broadcast %63 : vector<2x8x1xf32> to vector<2x8x128xf32>
    %65 = arith.divf %61, %64 : vector<2x8x128xf32>
    %c0_25 = arith.constant 0 : index
    %c0_26 = arith.constant 0 : index
    %c0_27 = arith.constant 0 : index
    %66 = vector.load %arg7[%c0_25, %c0_26, %c0_27] : memref<2x8x128xf32, #tpu.memory_space<vmem>>, vector<2x8x128xf32>
    tpu.vector_store %arg7[%c0_25, %c0_26, %c0_27], %65 {strides = array<i32>} : memref<2x8x128xf32, #tpu.memory_space<vmem>>, vector<2x8x128xf32>,
    return
  }
}

</mosaic_0001>

<llo_original>
// kernel: tpu_custom_call.1
$region0: #{tpu_custom_call.1}
  #allocation0 [shape = 'u32[]', space=smem, size = 0x4, offset = 0x4, fixed_abs, tag = 'smem constant byte address 0x4 - core index']
  #allocation1 [shape = 'u32[72,128]{1,0:T(1,128)}', space=vmem, size = 0x9000, scoped, tag = 'internal scratch']
  %s0 = inlined_call_operand.hbm [shape: bf16[24,128], index: 0, kind: input, shape index: {}]
  %s1 = inlined_call_operand.hbm [shape: f32[1,128], index: 1, kind: input, shape index: {}]
  %s2 = inlined_call_operand.vmem [shape: f32[1,128], index: 2, kind: input, shape index: {}]
  %s3 = inlined_call_operand.hbm [shape: bf16[128,256], index: 3, kind: input, shape index: {}]
  %s4 = inlined_call_operand.vmem [shape: f32[1,256], index: 4, kind: input, shape index: {}]
  %s5 = inlined_call_operand.hbm [shape: bf16[256,128], index: 5, kind: input, shape index: {}]
  %s6 = inlined_call_operand.vmem [shape: f32[1,128], index: 6, kind: input, shape index: {}]
  %s7 = inlined_call_operand.hbm [shape: f32[2,8,128], index: 7, kind: output, shape index: {}]
  %s8 = sld [smem:[#allocation0]]
  $region54: #{tpu_custom_call.1} parent=0
    _
  %s10 = ssub.s32 1, %s8
  %s11 = scalar_select 0, %s10, %s8
  $region1: #{tpu_custom_call.1} parent=0
    #allocation2 [shape = 'u8[6144]{0}', space=vmem, size = 0x1800, scoped, tag = 'input window, operand 0, single buffered']
    #allocation3 [shape = 's32[1]{0}', space=sflag, size = 0x4, scoped, tag = 'scoped memory for tpu_custom_call.1']
    #allocation4 [shape = 's32[1]{0}', space=sflag, size = 0x4, scoped, tag = 'scoped memory for tpu_custom_call.1']
    #allocation5 [shape = 'u8[512]{0}', space=vmem, size = 0x400, scoped, tag = 'input window, operand 1, single buffered']
    #allocation6 [shape = 's32[1]{0}', space=sflag, size = 0x4, scoped, tag = 'scoped memory for tpu_custom_call.1']
    #allocation7 [shape = 'u8[65536]{0}', space=vmem, size = 0x10000, scoped, tag = 'input window, operand 3, single buffered']
    #allocation8 [shape = 'u8[65536]{0}', space=vmem, size = 0x10000, scoped, tag = 'input window, operand 5, single buffered']
    #allocation9 [shape = 's32[1]{0}', space=sflag, size = 0x4, scoped, tag = 'scoped memory for tpu_custom_call.1']
    #allocation10 [shape = 'u8[8192]{0}', space=vmem, size = 0x2000, scoped, tag = 'output window, operand 0, single buffered']
    %12 = vsyncpa [#allocation3], 0
    %13 = vsyncpa [#allocation6], 0
    %14 = vsyncpa [#allocation9], 0
    %15 = vsyncpa [#allocation4], 0
    // Predicated region
    $region2: #{tpu_custom_call.1} parent=1 // pred_check
      _
    $region3: #{tpu_custom_call.1} parent=1 // pred_check_branch
      %17 = sbr.rel (0) target = $region5
    $region4: #{tpu_custom_call.1} parent=1 // pred_region
      %19 = vsyncadd [#allocation3], 0
      %s20 = sshll.u32 %s0, 4
      %s21 = int_to_ptr.hbm [resolvable:$true] %s20
      %s22 = sshll.u32 [#allocation2], 4
      %s23 = int_to_ptr.vmem [resolvable:$true] %s22
      %28 = dma.hbm_to_vmem [thread:$0]  %s21, 192, %s23, [#allocation3], 64, 64, 4
    $region5: #{tpu_custom_call.1} parent=1 // pred_fallthru
      _
    // Predicated region
    $region6: #{tpu_custom_call.1} parent=1 // pred_check
      _
    $region7: #{tpu_custom_call.1} parent=1 // pred_check_branch
      %30 = sbr.rel (0) target = $region9
    $region8: #{tpu_custom_call.1} parent=1 // pred_region
      %32 = vsyncadd [#allocation6], 0
      %s34 = sshll.u32 %s1, 4
      %s35 = int_to_ptr.hbm [resolvable:$true] %s34
      %s36 = sshll.u32 [#allocation5], 4
      %s37 = int_to_ptr.vmem [resolvable:$true] %s36
      %39 = dma.hbm_to_vmem [thread:$0]  %s35, 16, %s37, [#allocation6]
    $region9: #{tpu_custom_call.1} parent=1 // pred_fallthru
      _
    // Predicated region
    $region10: #{tpu_custom_call.1} parent=1 // pred_check
      _
    $region11: #{tpu_custom_call.1} parent=1 // pred_check_branch
      %41 = sbr.rel (0) target = $region13
    $region12: #{tpu_custom_call.1} parent=1 // pred_region
      _
    $region13: #{tpu_custom_call.1} parent=1 // pred_fallthru
      _
    // Predicated region
    $region14: #{tpu_custom_call.1} parent=1 // pred_check
      _
    $region15: #{tpu_custom_call.1} parent=1 // pred_check_branch
      %43 = sbr.rel (0) target = $region17
    $region16: #{tpu_custom_call.1} parent=1 // pred_region
      %45 = vsyncadd [#allocation6], 0
      %s46 = sshll.u32 %s3, 4
      %s47 = int_to_ptr.hbm [resolvable:$true] %s46
      %s48 = sshll.u32 [#allocation7], 4
      %s49 = int_to_ptr.vmem [resolvable:$true] %s48
      %54 = dma.hbm_to_vmem [thread:$0]  %s47, 2048, %s49, [#allocation6], 128, 128, 8
    $region17: #{tpu_custom_call.1} parent=1 // pred_fallthru
      _
    // Predicated region
    $region18: #{tpu_custom_call.1} parent=1 // pred_check
      _
    $region19: #{tpu_custom_call.1} parent=1 // pred_check_branch
      %56 = sbr.rel (0) target = $region21
    $region20: #{tpu_custom_call.1} parent=1 // pred_region
      _
    $region21: #{tpu_custom_call.1} parent=1 // pred_fallthru
      _
    // Predicated region
    $region22: #{tpu_custom_call.1} parent=1 // pred_check
      _
    $region23: #{tpu_custom_call.1} parent=1 // pred_check_branch
      %58 = sbr.rel (0) target = $region25
    $region24: #{tpu_custom_call.1} parent=1 // pred_region
      %60 = vsyncadd [#allocation9], 0
      %s61 = sshll.u32 %s5, 4
      %s62 = int_to_ptr.hbm [resolvable:$true] %s61
      %s63 = sshll.u32 [#allocation8], 4
      %s64 = int_to_ptr.vmem [resolvable:$true] %s63
      %69 = dma.hbm_to_vmem [thread:$0]  %s62, 2048, %s64, [#allocation9], 64, 64, 4
    $region25: #{tpu_custom_call.1} parent=1 // pred_fallthru
      _
    // Predicated region
    $region26: #{tpu_custom_call.1} parent=1 // pred_check
      _
    $region27: #{tpu_custom_call.1} parent=1 // pred_check_branch
      %71 = sbr.rel (0) target = $region29
    $region28: #{tpu_custom_call.1} parent=1 // pred_region
      _
    $region29: #{tpu_custom_call.1} parent=1 // pred_fallthru
      _
    // Predicated region
    $region30: #{tpu_custom_call.1} parent=1 // pred_check
      _
    $region31: #{tpu_custom_call.1} parent=1 // pred_check_branch
      %73 = sbr.rel (0) target = $region33
    $region32: #{tpu_custom_call.1} parent=1 // pred_region
      %75 = dma.done [#allocation3], 192
    $region33: #{tpu_custom_call.1} parent=1 // pred_fallthru
      _
    // Predicated region
    $region34: #{tpu_custom_call.1} parent=1 // pred_check
      _
    $region35: #{tpu_custom_call.1} parent=1 // pred_check_branch
      %77 = sbr.rel (0) target = $region37
    $region36: #{tpu_custom_call.1} parent=1 // pred_region
      %79 = dma.done [#allocation6], 16
    $region37: #{tpu_custom_call.1} parent=1 // pred_fallthru
      _
    // Predicated region
    $region38: #{tpu_custom_call.1} parent=1 // pred_check
      _
    $region39: #{tpu_custom_call.1} parent=1 // pred_check_branch
      %81 = sbr.rel (0) target = $region41
    $region40: #{tpu_custom_call.1} parent=1 // pred_region
      %83 = dma.done [#allocation6], 2048
    $region41: #{tpu_custom_call.1} parent=1 // pred_fallthru
      _
    // Predicated region
    $region42: #{tpu_custom_call.1} parent=1 // pred_check
      _
    $region43: #{tpu_custom_call.1} parent=1 // pred_check_branch
      %85 = sbr.rel (0) target = $region45
    $region44: #{tpu_custom_call.1} parent=1 // pred_region
      %87 = dma.done [#allocation9], 2048
    $region45: #{tpu_custom_call.1} parent=1 // pred_fallthru
      _
    %v88 = vld [vmem:[#allocation2] sm:$0xf]
    %v89 = vld [vmem:[#allocation2 + $0x4] sm:$0xf]
    %v90 = vld [vmem:[#allocation2 + $0x8] sm:$0xf]
    %v91 = vunpack.c.l.bf16 %v88
    %v92 = vunpack.c.l.bf16 %v89
    %v93 = vunpack.c.l.bf16 %v90
    %v94 = vld [vmem:[#allocation5] sm:$0x1]
    %v95 = vld [vmem:[%s2] sm:$0x1]
    %96 = vadd.xlane.f32.xlu0 %v91
    %v97 = vpop.xlane.xlu0 %96
    %98 = vadd.xlane.f32.xlu0 %v92
    %v99 = vpop.xlane.xlu0 %98
    %100 = vadd.xlane.f32.xlu0 %v93
    %v101 = vpop.xlane.xlu0 %100
    %v102 = vrcp.pop 128.0
    %v103 = vmul.f32 128.0, %v102
    %v104 = vsub.f32 1.0, %v103
    %v105 = vmul.f32 %v102, %v104
    %v106 = vadd.f32 %v102, %v105
    %vm107 = vweird.f32 %v102
    %v108 = vsel %vm107, %v102, %v106
    %v109 = vmul.f32 %v97, %v108
    %v110 = vmul.f32 %v99, %v108
    %v111 = vmul.f32 %v101, %v108
    %v112 = vmul.f32 %v91, %v91
    %v113 = vmul.f32 %v92, %v92
    %v114 = vmul.f32 %v93, %v93
    %115 = vadd.xlane.f32.xlu0 %v112
    %v116 = vpop.xlane.xlu0 %115
    %117 = vadd.xlane.f32.xlu0 %v113
    %v118 = vpop.xlane.xlu0 %117
    %119 = vadd.xlane.f32.xlu0 %v114
    %v120 = vpop.xlane.xlu0 %119
    %v121 = vmul.f32 %v116, %v108
    %v122 = vmul.f32 %v118, %v108
    %v123 = vmul.f32 %v120, %v108
    %v124 = vmul.f32 %v109, %v109
    %v125 = vmul.f32 %v110, %v110
    %v126 = vmul.f32 %v111, %v111
    %v127 = vsub.f32 %v121, %v124
    %v128 = vsub.f32 %v122, %v125
    %v129 = vsub.f32 %v123, %v126
    %v130 = vsub.f32 %v91, %v109
    %v131 = vsub.f32 %v92, %v110
    %v132 = vsub.f32 %v93, %v111
    %v133 = vadd.f32 %v127, 1e-05
    %v134 = vadd.f32 %v128, 1e-05
    %v135 = vadd.f32 %v129, 1e-05
    %v136 = vrsqrt.pop %v133
    %v137 = vmul.f32 %v136, %v133
    %v138 = vmul.f32 %v137, %v136
    %v139 = vmul.f32 0.5, %v138
    %v140 = vsub.f32 1.5, %v139
    %v141 = vmul.f32 %v136, %v140
    %vm142 = vweird.f32 %v133
    %vm143 = vweird.f32 %v136
    %vm144 = vmor %vm142, %vm143
    %v145 = vsel %vm144, %v136, %v141
    %v146 = vrsqrt.pop %v134
    %v147 = vmul.f32 %v146, %v134
    %v148 = vmul.f32 %v147, %v146
    %v149 = vmul.f32 0.5, %v148
    %v150 = vsub.f32 1.5, %v149
    %v151 = vmul.f32 %v146, %v150
    %vm152 = vweird.f32 %v134
    %vm153 = vweird.f32 %v146
    %vm154 = vmor %vm152, %vm153
    %v155 = vsel %vm154, %v146, %v151
    %v156 = vrsqrt.pop %v135
    %v157 = vmul.f32 %v156, %v135
    %v158 = vmul.f32 %v157, %v156
    %v159 = vmul.f32 0.5, %v158
    %v160 = vsub.f32 1.5, %v159
    %v161 = vmul.f32 %v156, %v160
    %vm162 = vweird.f32 %v135
    %vm163 = vweird.f32 %v156
    %vm164 = vmor %vm162, %vm163
    %v165 = vsel %vm164, %v156, %v161
    %v166 = vmul.f32 %v130, %v145
    %v167 = vmul.f32 %v131, %v155
    %v168 = vmul.f32 %v132, %v165
    %v170 = vperm.slane %v94, 0
    %v172 = vmul.f32 %v166, %v170
    %v173 = vmul.f32 %v167, %v170
    %v174 = vmul.f32 %v168, %v170
    %v176 = vperm.slane %v95, 0
    %v178 = vadd.f32 %v172, %v176
    %v179 = vadd.f32 %v173, %v176
    %v180 = vadd.f32 %v174, %v176
    %v181 = vpack.c.bf16 %v179, %v178
    %v182 = vpack.c.bf16 %v180, %v180
    %v183 = vld [vmem:[#allocation7] sm:$0xff]
    %v184 = vld [vmem:[#allocation7 + $0x8] sm:$0xff]
    %v185 = vld [vmem:[#allocation7 + $0x10] sm:$0xff]
    %v186 = vld [vmem:[#allocation7 + $0x18] sm:$0xff]
    %v187 = vld [vmem:[#allocation7 + $0x20] sm:$0xff]
    %v188 = vld [vmem:[#allocation7 + $0x28] sm:$0xff]
    %v189 = vld [vmem:[#allocation7 + $0x30] sm:$0xff]
    %v190 = vld [vmem:[#allocation7 + $0x38] sm:$0xff]
    %v191 = vld [vmem:[#allocation7 + $0x40] sm:$0xff]
    %v192 = vld [vmem:[#allocation7 + $0x48] sm:$0xff]
    %v193 = vld [vmem:[#allocation7 + $0x50] sm:$0xff]
    %v194 = vld [vmem:[#allocation7 + $0x58] sm:$0xff]
    %v195 = vld [vmem:[#allocation7 + $0x60] sm:$0xff]
    %v196 = vld [vmem:[#allocation7 + $0x68] sm:$0xff]
    %v197 = vld [vmem:[#allocation7 + $0x70] sm:$0xff]
    %v198 = vld [vmem:[#allocation7 + $0x78] sm:$0xff]
    %v199 = vld [vmem:[%s4] sm:$0x3]
    %v201 = vperm.slane %v199, 0
    %v202 = vperm.slane %v199, 1
    %v221 = vunpack.c.l.b16 %v183
    %v222 = vunpack.c.h.b16 %v183
    %v223 = vunpack.c.l.b16 %v184
    %v224 = vunpack.c.h.b16 %v184
    %v225 = vunpack.c.l.b16 %v185
    %v226 = vunpack.c.h.b16 %v185
    %v227 = vunpack.c.l.b16 %v186
    %v228 = vunpack.c.h.b16 %v186
    %v229 = vunpack.c.l.b16 %v187
    %v230 = vunpack.c.h.b16 %v187
    %v231 = vunpack.c.l.b16 %v188
    %v232 = vunpack.c.h.b16 %v188
    %v233 = vunpack.c.l.b16 %v189
    %v234 = vunpack.c.h.b16 %v189
    %v235 = vunpack.c.l.b16 %v190
    %v236 = vunpack.c.h.b16 %v190
    %v237 = vunpack.c.l.b16 %v191
    %v238 = vunpack.c.h.b16 %v191
    %v239 = vunpack.c.l.b16 %v192
    %v240 = vunpack.c.h.b16 %v192
    %v241 = vunpack.c.l.b16 %v193
    %v242 = vunpack.c.h.b16 %v193
    %v243 = vunpack.c.l.b16 %v194
    %v244 = vunpack.c.h.b16 %v194
    %v245 = vunpack.c.l.b16 %v195
    %v246 = vunpack.c.h.b16 %v195
    %v247 = vunpack.c.l.b16 %v196
    %v248 = vunpack.c.h.b16 %v196
    %v249 = vunpack.c.l.b16 %v197
    %v250 = vunpack.c.h.b16 %v197
    %v251 = vunpack.c.l.b16 %v198
    %v252 = vunpack.c.h.b16 %v198
    %v253 = vpack.c.b16 %v223, %v221
    %v254 = vpack.c.b16 %v224, %v222
    %v255 = vpack.c.b16 %v227, %v225
    %v256 = vpack.c.b16 %v228, %v226
    %v257 = vpack.c.b16 %v231, %v229
    %v258 = vpack.c.b16 %v232, %v230
    %v259 = vpack.c.b16 %v235, %v233
    %v260 = vpack.c.b16 %v236, %v234
    %v261 = vpack.c.b16 %v239, %v237
    %v262 = vpack.c.b16 %v240, %v238
    %v263 = vpack.c.b16 %v243, %v241
    %v264 = vpack.c.b16 %v244, %v242
    %v265 = vpack.c.b16 %v247, %v245
    %v266 = vpack.c.b16 %v248, %v246
    %v267 = vpack.c.b16 %v251, %v249
    %v268 = vpack.c.b16 %v252, %v250
    %285 = vmatpush.bf16.msra.mxu0 %v267
    %286 = vmatpush.bf16.msra.mxu0 %v265
    %287 = vmatpush.bf16.msra.mxu0 %v263
    %288 = vmatpush.bf16.msra.mxu0 %v261
    %289 = vmatpush.bf16.msra.mxu0 %v259
    %290 = vmatpush.bf16.msra.mxu0 %v257
    %291 = vmatpush.bf16.msra.mxu0 %v255
    %292 = vmatpush.bf16.msra.mxu0 %v253
    %293 = vmatmul.bf16.gmra.mxu0 %v181
    %v294 = vpop.f32.mrf.mxu0
    %v295 = vadd.f32 %v201, %v294
    %v296 = vpop.f32.mrf.mxu0
    %v297 = vadd.f32 %v201, %v296
    %298 = vmatmul.bf16.gmra.mxu0 %v182
    %v299 = vpop.f32.mrf.mxu0
    %v300 = vadd.f32 %v201, %v299
    %v301 = vpop.f32.mrf.mxu0
    %302 = vdwg.mxu0
    %303 = vmatpush.bf16.msra.mxu0 %v268
    %304 = vmatpush.bf16.msra.mxu0 %v266
    %305 = vmatpush.bf16.msra.mxu0 %v264
    %306 = vmatpush.bf16.msra.mxu0 %v262
    %307 = vmatpush.bf16.msra.mxu0 %v260
    %308 = vmatpush.bf16.msra.mxu0 %v258
    %309 = vmatpush.bf16.msra.mxu0 %v256
    %310 = vmatpush.bf16.msra.mxu0 %v254
    %311 = vmatmul.bf16.gmra.mxu0 %v181
    %v312 = vpop.f32.mrf.mxu0
    %v313 = vadd.f32 %v202, %v312
    %v314 = vpop.f32.mrf.mxu0
    %v315 = vadd.f32 %v202, %v314
    %316 = vmatmul.bf16.gmra.mxu0 %v182
    %v317 = vpop.f32.mrf.mxu0
    %v318 = vadd.f32 %v202, %v317
    %v319 = vpop.f32.mrf.mxu0
    %320 = vdwg.mxu0
    %v321 = vmul.f32 %v295, 0.5
    %v322 = vmul.f32 %v313, 0.5
    %v323 = vmul.f32 %v297, 0.5
    %v324 = vmul.f32 %v315, 0.5
    %v325 = vmul.f32 %v300, 0.5
    %v326 = vmul.f32 %v318, 0.5
    %v327 = vmul.f32 %v295, 0.044715
    %v328 = vmul.f32 %v313, 0.044715
    %v329 = vmul.f32 %v297, 0.044715
    %v330 = vmul.f32 %v315, 0.044715
    %v331 = vmul.f32 %v300, 0.044715
    %v332 = vmul.f32 %v318, 0.044715
    %v333 = vmul.f32 %v327, %v295
    %v334 = vmul.f32 %v328, %v313
    %v335 = vmul.f32 %v329, %v297
    %v336 = vmul.f32 %v330, %v315
    %v337 = vmul.f32 %v331, %v300
    %v338 = vmul.f32 %v332, %v318
    %v339 = vmul.f32 %v333, %v295
    %v340 = vmul.f32 %v334, %v313
    %v341 = vmul.f32 %v335, %v297
    %v342 = vmul.f32 %v336, %v315
    %v343 = vmul.f32 %v337, %v300
    %v344 = vmul.f32 %v338, %v318
    %v345 = vadd.f32 %v295, %v339
    %v346 = vadd.f32 %v313, %v340
    %v347 = vadd.f32 %v297, %v341
    %v348 = vadd.f32 %v315, %v342
    %v349 = vadd.f32 %v300, %v343
    %v350 = vadd.f32 %v318, %v344
    %v351 = vmul.f32 %v345, 0.7978846
    %v352 = vmul.f32 %v346, 0.7978846
    %v353 = vmul.f32 %v347, 0.7978846
    %v354 = vmul.f32 %v348, 0.7978846
    %v355 = vmul.f32 %v349, 0.7978846
    %v356 = vmul.f32 %v350, 0.7978846
    %v357 = vtanh.pop %v351
    %v358 = vtanh.pop %v352
    %v359 = vtanh.pop %v353
    %v360 = vtanh.pop %v354
    %v361 = vtanh.pop %v355
    %v362 = vtanh.pop %v356
    %v363 = vadd.f32 %v357, 1.0
    %v364 = vadd.f32 %v358, 1.0
    %v365 = vadd.f32 %v359, 1.0
    %v366 = vadd.f32 %v360, 1.0
    %v367 = vadd.f32 %v361, 1.0
    %v368 = vadd.f32 %v362, 1.0
    %v369 = vmul.f32 %v321, %v363
    %v370 = vmul.f32 %v322, %v364
    %v371 = vmul.f32 %v323, %v365
    %v372 = vmul.f32 %v324, %v366
    %v373 = vmul.f32 %v325, %v367
    %v374 = vmul.f32 %v326, %v368
    %v375 = vpack.c.bf16 %v371, %v369
    %v376 = vpack.c.bf16 %v372, %v370
    %v377 = vpack.c.bf16 %v373, %v373
    %v378 = vpack.c.bf16 %v374, %v374
    %v379 = vld [vmem:[#allocation8] sm:$0xf]
    %v380 = vld [vmem:[#allocation8 + $0x4] sm:$0xf]
    %v381 = vld [vmem:[#allocation8 + $0x8] sm:$0xf]
    %v382 = vld [vmem:[#allocation8 + $0xc] sm:$0xf]
    %v383 = vld [vmem:[#allocation8 + $0x10] sm:$0xf]
    %v384 = vld [vmem:[#allocation8 + $0x14] sm:$0xf]
    %v385 = vld [vmem:[#allocation8 + $0x18] sm:$0xf]
    %v386 = vld [vmem:[#allocation8 + $0x1c] sm:$0xf]
    %v387 = vld [vmem:[#allocation8 + $0x20] sm:$0xf]
    %v388 = vld [vmem:[#allocation8 + $0x24] sm:$0xf]
    %v389 = vld [vmem:[#allocation8 + $0x28] sm:$0xf]
    %v390 = vld [vmem:[#allocation8 + $0x2c] sm:$0xf]
    %v391 = vld [vmem:[#allocation8 + $0x30] sm:$0xf]
    %v392 = vld [vmem:[#allocation8 + $0x34] sm:$0xf]
    %v393 = vld [vmem:[#allocation8 + $0x38] sm:$0xf]
    %v394 = vld [vmem:[#allocation8 + $0x3c] sm:$0xf]
    %v395 = vld [vmem:[#allocation8 + $0x40] sm:$0xf]
    %v396 = vld [vmem:[#allocation8 + $0x44] sm:$0xf]
    %v397 = vld [vmem:[#allocation8 + $0x48] sm:$0xf]
    %v398 = vld [vmem:[#allocation8 + $0x4c] sm:$0xf]
    %v399 = vld [vmem:[#allocation8 + $0x50] sm:$0xf]
    %v400 = vld [vmem:[#allocation8 + $0x54] sm:$0xf]
    %v401 = vld [vmem:[#allocation8 + $0x58] sm:$0xf]
    %v402 = vld [vmem:[#allocation8 + $0x5c] sm:$0xf]
    %v403 = vld [vmem:[#allocation8 + $0x60] sm:$0xf]
    %v404 = vld [vmem:[#allocation8 + $0x64] sm:$0xf]
    %v405 = vld [vmem:[#allocation8 + $0x68] sm:$0xf]
    %v406 = vld [vmem:[#allocation8 + $0x6c] sm:$0xf]
    %v407 = vld [vmem:[#allocation8 + $0x70] sm:$0xf]
    %v408 = vld [vmem:[#allocation8 + $0x74] sm:$0xf]
    %v409 = vld [vmem:[#allocation8 + $0x78] sm:$0xf]
    %v410 = vld [vmem:[#allocation8 + $0x7c] sm:$0xf]
    %v411 = vld [vmem:[%s6] sm:$0x1]
    %v413 = vperm.slane %v411, 0
    %v447 = vunpack.c.l.b16 %v379
    %v448 = vunpack.c.l.b16 %v380
    %v449 = vunpack.c.l.b16 %v381
    %v450 = vunpack.c.l.b16 %v382
    %v451 = vunpack.c.l.b16 %v383
    %v452 = vunpack.c.l.b16 %v384
    %v453 = vunpack.c.l.b16 %v385
    %v454 = vunpack.c.l.b16 %v386
    %v455 = vunpack.c.l.b16 %v387
    %v456 = vunpack.c.l.b16 %v388
    %v457 = vunpack.c.l.b16 %v389
    %v458 = vunpack.c.l.b16 %v390
    %v459 = vunpack.c.l.b16 %v391
    %v460 = vunpack.c.l.b16 %v392
    %v461 = vunpack.c.l.b16 %v393
    %v462 = vunpack.c.l.b16 %v394
    %v463 = vunpack.c.l.b16 %v395
    %v464 = vunpack.c.l.b16 %v396
    %v465 = vunpack.c.l.b16 %v397
    %v466 = vunpack.c.l.b16 %v398
    %v467 = vunpack.c.l.b16 %v399
    %v468 = vunpack.c.l.b16 %v400
    %v469 = vunpack.c.l.b16 %v401
    %v470 = vunpack.c.l.b16 %v402
    %v471 = vunpack.c.l.b16 %v403
    %v472 = vunpack.c.l.b16 %v404
    %v473 = vunpack.c.l.b16 %v405
    %v474 = vunpack.c.l.b16 %v406
    %v475 = vunpack.c.l.b16 %v407
    %v476 = vunpack.c.l.b16 %v408
    %v477 = vunpack.c.l.b16 %v409
    %v478 = vunpack.c.l.b16 %v410
    %v479 = vpack.c.b16 %v448, %v447
    %v480 = vpack.c.b16 %v450, %v449
    %v481 = vpack.c.b16 %v452, %v451
    %v482 = vpack.c.b16 %v454, %v453
    %v483 = vpack.c.b16 %v456, %v455
    %v484 = vpack.c.b16 %v458, %v457
    %v485 = vpack.c.b16 %v460, %v459
    %v486 = vpack.c.b16 %v462, %v461
    %v487 = vpack.c.b16 %v464, %v463
    %v488 = vpack.c.b16 %v466, %v465
    %v489 = vpack.c.b16 %v468, %v467
    %v490 = vpack.c.b16 %v470, %v469
    %v491 = vpack.c.b16 %v472, %v471
    %v492 = vpack.c.b16 %v474, %v473
    %v493 = vpack.c.b16 %v476, %v475
    %v494 = vpack.c.b16 %v478, %v477
    %511 = vmatpush.bf16.msra.mxu0 %v486
    %512 = vmatpush.bf16.msra.mxu0 %v485
    %513 = vmatpush.bf16.msra.mxu0 %v484
    %514 = vmatpush.bf16.msra.mxu0 %v483
    %515 = vmatpush.bf16.msra.mxu0 %v482
    %516 = vmatpush.bf16.msra.mxu0 %v481
    %517 = vmatpush.bf16.msra.mxu0 %v480
    %518 = vmatpush.bf16.msra.mxu0 %v479
    %519 = vmatmul.bf16.gmra.mxu0 %v375
    %v520 = vpop.f32.mrf.mxu0
    %v521 = vadd.f32 %v413, %v520
    %v522 = vpop.f32.mrf.mxu0
    %v523 = vadd.f32 %v413, %v522
    %524 = vmatmul.bf16.gmra.mxu0 %v377
    %v525 = vpop.f32.mrf.mxu0
    %v526 = vadd.f32 %v413, %v525
    %v527 = vpop.f32.mrf.mxu0
    %528 = vdwg.mxu0
    %529 = vmatpush.bf16.msra.mxu0 %v494
    %530 = vmatpush.bf16.msra.mxu0 %v493
    %531 = vmatpush.bf16.msra.mxu0 %v492
    %532 = vmatpush.bf16.msra.mxu0 %v491
    %533 = vmatpush.bf16.msra.mxu0 %v490
    %534 = vmatpush.bf16.msra.mxu0 %v489
    %535 = vmatpush.bf16.msra.mxu0 %v488
    %536 = vmatpush.bf16.msra.mxu0 %v487
    %537 = vmatmul.bf16.gmra.mxu0 %v376
    %v538 = vpop.f32.mrf.mxu0
    %v539 = vadd.f32 %v521, %v538
    %v540 = vpop.f32.mrf.mxu0
    %v541 = vadd.f32 %v523, %v540
    %542 = vmatmul.bf16.gmra.mxu0 %v378
    %v543 = vpop.f32.mrf.mxu0
    %v544 = vadd.f32 %v526, %v543
    %v545 = vpop.f32.mrf.mxu0
    %546 = vdwg.mxu0
    %v548 = vrot.slane %v544, 1
    %v549 = vperm.slane %v544, 0
    %v550 = vperm.slane %v548, 0
    %v553 = vadd.f32 %v539, %v549
    %v554 = vadd.f32 %v541, %v550
    %555 = vmax.xlane.f32.xlu0 %v553
    %v556 = vpop.xlane.xlu0 %555
    %557 = vmax.xlane.f32.xlu0 %v554
    %v558 = vpop.xlane.xlu0 %557
    %v559 = vsub.f32 %v553, %v556
    %v560 = vsub.f32 %v554, %v558
    %v561 = vmul.f32 %v559, 1.442695
    %v562 = vpow.pop %v561
    %v563 = vmul.f32 %v560, 1.442695
    %v564 = vpow.pop %v563
    %565 = vadd.xlane.f32.xlu0 %v562
    %v566 = vpop.xlane.xlu0 %565
    %567 = vadd.xlane.f32.xlu0 %v564
    %v568 = vpop.xlane.xlu0 %567
    %v569 = vrcp.pop %v566
    %v570 = vmul.f32 %v566, %v569
    %v571 = vsub.f32 1.0, %v570
    %v572 = vmul.f32 %v569, %v571
    %v573 = vadd.f32 %v569, %v572
    %vm574 = vweird.f32 %v566
    %vm575 = vweird.f32 %v569
    %vm576 = vmor %vm574, %vm575
    %v577 = vsel %vm576, %v569, %v573
    %v578 = vand.u32 2147483647, %v566
    %vm579 = vcmp.eq.f32.partialorder %v578, 8.507059e+37
    %v580 = vand.u32 %v566, 2147483648
    %v581 = vor.u32 1.1754944e-38, %v580
    %v582 = vsel %vm579, %v581, %v577
    %v583 = vmul.f32 %v562, %v582
    %v584 = vrcp.pop %v568
    %v585 = vmul.f32 %v568, %v584
    %v586 = vsub.f32 1.0, %v585
    %v587 = vmul.f32 %v584, %v586
    %v588 = vadd.f32 %v584, %v587
    %vm589 = vweird.f32 %v568
    %vm590 = vweird.f32 %v584
    %vm591 = vmor %vm589, %vm590
    %v592 = vsel %vm591, %v584, %v588
    %v593 = vand.u32 2147483647, %v568
    %vm594 = vcmp.eq.f32.partialorder %v593, 8.507059e+37
    %v595 = vand.u32 %v568, 2147483648
    %v596 = vor.u32 1.1754944e-38, %v595
    %v597 = vsel %vm594, %v596, %v592
    %v598 = vmul.f32 %v564, %v597
    %599 = vst [vmem:[#allocation10] sm:$0xff] %v583
    %600 = vst [vmem:[#allocation10 + $0x8] sm:$0xff] %v598
    // Predicated region
    $region46: #{tpu_custom_call.1} parent=1 // pred_check
      _
    $region47: #{tpu_custom_call.1} parent=1 // pred_check_branch
      %602 = sbr.rel (0) target = $region49
    $region48: #{tpu_custom_call.1} parent=1 // pred_region
      %604 = vsyncadd [#allocation4], 0
      %s605 = sshll.u32 [#allocation10], 4
      %s606 = int_to_ptr.vmem [resolvable:$true] %s605
      %s607 = sshll.u32 %s7, 4
      %s608 = int_to_ptr.hbm [resolvable:$true] %s607
      %613 = dma.vmem_to_hbm [thread:$0]  %s606, 256, %s608, [#allocation4], 128, 128, 8
    $region49: #{tpu_custom_call.1} parent=1 // pred_fallthru
      _
    // Predicated region
    $region50: #{tpu_custom_call.1} parent=1 // pred_check
      _
    $region51: #{tpu_custom_call.1} parent=1 // pred_check_branch
      %615 = sbr.rel (0) target = $region53
    $region52: #{tpu_custom_call.1} parent=1 // pred_region
      %617 = dma.done [#allocation4], 256
    $region53: #{tpu_custom_call.1} parent=1 // pred_fallthru
      _
    %618 = vsyncpa [#allocation3], 1
    %619 = vsyncpa [#allocation6], 1
    %620 = vsyncpa [#allocation9], 1
    %621 = vsyncpa [#allocation4], 1

</llo_original>
